<compile_context>
chip_gen: v7x
topology: tpu7x:2x2x1
jax: 0.10.0
libtpu: 0.0.40
codegen_flags: <defaults>
</compile_context>

<pallas_src>
import functools

import jax
import jax.numpy as jnp
import numpy as np
from jax import lax
from jax.experimental import pallas as pl
from jax.experimental.pallas import tpu as pltpu

# ---------------- config (synthetic, small) ----------------
VOCAB_SIZE = 64
D_MODEL = 128
MAX_LEN = 32
LAYER_NORM_EPS = 1e-5
BATCH = 2
SEQ = 8


# ---------------- sinusoid table (parameter setup, plain JAX) ----------------
def sinusoid_encoding_table(max_len, d_model, padding_idx=None):
    pos = jnp.arange(max_len, dtype=jnp.float32)[:, None]          # (L, 1)
    dim = jnp.arange(d_model // 2, dtype=jnp.float32)[None, :]     # (1, D/2)
    angle = pos / (10000.0 ** (2.0 * dim / d_model))                # (L, D/2)
    out = jnp.zeros((max_len, d_model), dtype=jnp.float32)
    out = out.at[:, 0::2].set(jnp.sin(angle))
    out = out.at[:, 1::2].set(jnp.cos(angle))
    if padding_idx is not None:
        out = out.at[padding_idx].set(0.0)
    return out


# ---------------- Pallas kernel ----------------
def embedding_kernel(ids_ref,                   # (TILE_R, 1) int32 (VMEM)
                     wemb_ref,                  # (V, D)  bf16 (VMEM)
                     pos_ref,                   # (S, D)  f32  (VMEM) -- pre-sliced
                     gamma_ref, beta_ref,       # (1, D)  f32  (VMEM)
                     out_ref,                   # (TILE_R, D) f32 (VMEM)
                     *, eps):
    tile_r = ids_ref.shape[0]
    vocab = wemb_ref.shape[0]
    seq_len = pos_ref.shape[0]
    d = wemb_ref.shape[1]

    # ---- word-embedding gather as a single bf16 one-hot MXU matmul ----
    # one-hot entries are exactly 0/1 in bf16, so this is an exact row selection
    # of the bf16 table values; accumulation is f32.
    ids = ids_ref[...]                                               # (R, 1) i32
    onehot = (ids == lax.broadcasted_iota(jnp.int32, (tile_r, vocab), 1)
              ).astype(jnp.bfloat16)                                 # (R, V) bf16
    x = jnp.dot(onehot, wemb_ref[...],
                preferred_element_type=jnp.float32)                  # (R, D) f32

    # ---- positional add: rows are (batch, seq) with seq fastest and
    # tile_r % seq_len == 0, so broadcast the (S, D) slab over the batch axis.
    # (Reshape only splits the sublane axis in multiples of 8 -> layout-free.)
    nb = tile_r // seq_len
    x = (x.reshape(nb, seq_len, d) + pos_ref[...][None, :, :]).reshape(tile_r, d)

    # ---- LayerNorm over d_model: sum and sum-of-squares in parallel ----
    inv_d = 1.0 / d
    s1 = jnp.sum(x, axis=-1, keepdims=True)
    s2 = jnp.sum(x * x, axis=-1, keepdims=True)
    mean = s1 * inv_d
    var = s2 * inv_d - mean * mean                                   # E[x^2]-mean^2
    inv = lax.rsqrt(var + eps)                                        # EUP, ~free
    out_ref[...] = (x - mean) * inv * gamma_ref[...] + beta_ref[...]
    # Dropout is identity in eval mode -> nothing to do.


def _pick_row_tile(rows, seq_len):
    """Rows per grid step: a whole number of sequences, <=1024 rows, and >=2
    grid steps when possible so both v7x TensorCores get work."""
    assert rows % seq_len == 0
    n_seq = rows // seq_len
    divisors = [k for k in range(1, n_seq + 1) if n_seq % k == 0]
    cands = [k for k in divisors if k * seq_len <= 1024 and n_seq // k >= 2]
    if not cands:
        cands = [k for k in divisors if k * seq_len <= 1024] or [1]
    tile_r = max(cands) * seq_len
    # (8,128) block rule: sublane dim must be a multiple of 8 or the full extent.
    if tile_r % 8 != 0 and tile_r != rows:
        tile_r = rows
    return tile_r


def embedding_forward(input_ids, word_emb_bf16, pos_table, gamma, beta,
                      start_pos=0, eps=LAYER_NORM_EPS):
    B, S = input_ids.shape
    V, D = word_emb_bf16.shape
    L, _ = pos_table.shape
    R = B * S

    # PyTorch nn.Embedding would raise on out-of-range positions; dynamic_slice
    # clamps, so guard explicitly when start_pos is static.
    if isinstance(start_pos, int):
        assert start_pos + S <= L, "position ids exceed max_len"

    # Positions are contiguous and shared across the batch: slice once on the
    # host instead of doing an in-kernel gather / one-hot matmul.
    pos_slab = lax.dynamic_slice(pos_table.astype(jnp.float32),
                                 (start_pos, 0), (S, D))             # (S, D) f32

    tile_r = _pick_row_tile(R, S)
    grid = (R // tile_r,)

    grid_spec = pltpu.PrefetchScalarGridSpec(
        num_scalar_prefetch=0,
        grid=grid,
        in_specs=[
            # flattened token ids, one row-tile per grid step
            pl.BlockSpec((tile_r, 1), lambda i: (i, 0)),
            # full word-embedding table (bf16), VMEM-resident (toy vocab)
            pl.BlockSpec((V, D), lambda i: (0, 0)),
            # pre-sliced positional slab, VMEM-resident
            pl.BlockSpec((S, D), lambda i: (0, 0)),
            # layer-norm scale / bias, shape (1, D)
            pl.BlockSpec((1, D), lambda i: (0, 0)),
            pl.BlockSpec((1, D), lambda i: (0, 0)),
        ],
        out_specs=pl.BlockSpec((tile_r, D), lambda i: (i, 0)),
    )

    kernel = functools.partial(embedding_kernel, eps=eps)
    out_flat = pl.pallas_call(
        kernel,
        out_shape=jax.ShapeDtypeStruct((R, D), jnp.float32),
        grid_spec=grid_spec,
        compiler_params=pltpu.CompilerParams(
            dimension_semantics=("parallel",)),
    )(
        input_ids.reshape(R, 1).astype(jnp.int32),
        word_emb_bf16.astype(jnp.bfloat16),
        pos_slab,
        gamma.reshape(1, D).astype(jnp.float32),
        beta.reshape(1, D).astype(jnp.float32),
    )
    return out_flat.reshape(B, S, D)


# ---------------- pure-JAX reference (same bf16 table contract) ----------------
def reference_forward(input_ids, word_emb_bf16, pos_table, gamma, beta,
                      start_pos=0, eps=LAYER_NORM_EPS):
    B, S = input_ids.shape
    w = word_emb_bf16.astype(jnp.float32)          # bf16-rounded values, f32 math
    seq = jnp.arange(start_pos, start_pos + S)
    emb = w[input_ids] + pos_table[seq][None, :, :]
    mean = emb.mean(-1, keepdims=True)
    var = ((emb - mean) ** 2).mean(-1, keepdims=True)
    return (emb - mean) / jnp.sqrt(var + eps) * gamma + beta


if __name__ == "__main__":
    key = jax.random.PRNGKey(0)
    k_w, k_ids = jax.random.split(key)

    # Deterministic parameter init (matches module __init__ shapes):
    #   word_embedding: (vocab_size, d_model), N(0, 1), stored bf16 on TPU
    #   position_embedding: frozen sinusoid table, padding_idx=0 (f32)
    #   layer_norm: gamma=ones, beta=zeros
    word_emb = jax.random.normal(k_w, (VOCAB_SIZE, D_MODEL), dtype=jnp.float32)
    word_emb_bf16 = word_emb.astype(jnp.bfloat16)
    pos_table = sinusoid_encoding_table(MAX_LEN, D_MODEL, padding_idx=0)
    gamma = jnp.ones((D_MODEL,), dtype=jnp.float32)
    beta = jnp.zeros((D_MODEL,), dtype=jnp.float32)

    input_ids = jax.random.randint(k_ids, (BATCH, SEQ), 0, VOCAB_SIZE,
                                   dtype=jnp.int32)

    out = embedding_forward(input_ids, word_emb_bf16, pos_table, gamma, beta)
    out = jax.block_until_ready(out)

    ref = reference_forward(input_ids, word_emb_bf16, pos_table, gamma, beta)
    # Tolerance reflects the f32 LN contract (E[x^2]-mean^2 formulation) on top
    # of exact bf16-table row selection.
    np.testing.assert_allclose(np.asarray(out), np.asarray(ref),
                               rtol=1e-5, atol=2e-5)

    print("KERNEL_OK")
</pallas_src>

<mosaic_0001>
module attributes {stable_mosaic.version = 11 : i64} {
  func.func @embedding_kernel(%arg0: i32, %arg1: memref<8x1xi32, #tpu.memory_space<vmem>>, %arg2: memref<64x128xbf16, #tpu.memory_space<vmem>>, %arg3: memref<8x128xf32, #tpu.memory_space<vmem>>, %arg4: memref<1x128xf32, #tpu.memory_space<vmem>>, %arg5: memref<1x128xf32, #tpu.memory_space<vmem>>, %arg6: memref<8x128xf32, #tpu.memory_space<vmem>>) attributes {dimension_semantics = [#tpu.dimension_semantics<parallel>], iteration_bounds = array<i64: 2>, scalar_prefetch = 0 : i64, scratch_operands = 0 : i64, tpu.core_type = #tpu.core_type<tc>, window_params = [{transform_indices = @transform_0, window_bounds = array<i64: 8, 1>}, {pipeline_mode = #tpu.pipeline_mode<synchronous>, transform_indices = @transform_1, window_bounds = array<i64: 64, 128>}, {pipeline_mode = #tpu.pipeline_mode<synchronous>, transform_indices = @transform_2, window_bounds = array<i64: 8, 128>}, {pipeline_mode = #tpu.pipeline_mode<synchronous>, transform_indices = @transform_3, window_bounds = array<i64: 1, 128>}, {pipeline_mode = #tpu.pipeline_mode<synchronous>, transform_indices = @transform_4, window_bounds = array<i64: 1, 128>}, {transform_indices = @transform_5, window_bounds = array<i64: 8, 128>}]} {
    %c0 = arith.constant 0 : index
    %c0_0 = arith.constant 0 : index
    %0 = vector.load %arg1[%c0, %c0_0] : memref<8x1xi32, #tpu.memory_space<vmem>>, vector<8x1xi32>
    %1 = tpu.iota {dimensions = array<i32: 1>} : vector<8x64xi32>
    %2 = vector.broadcast %0 : vector<8x1xi32> to vector<8x64xi32>
    %3 = arith.cmpi eq, %2, %1 : vector<8x64xi32>
    %4 = arith.extui %3 : vector<8x64xi1> to vector<8x64xi32>
    %5 = arith.sitofp %4 : vector<8x64xi32> to vector<8x64xf32>
    %6 = arith.truncf %5 : vector<8x64xf32> to vector<8x64xbf16>
    %c0_1 = arith.constant 0 : index
    %c0_2 = arith.constant 0 : index
    %7 = vector.load %arg2[%c0_1, %c0_2] : memref<64x128xbf16, #tpu.memory_space<vmem>>, vector<64x128xbf16>
    %cst = arith.constant dense<0.000000e+00> : vector<8x128xf32>
    %8 = tpu.matmul %6, %7, %cst {dimension_numbers = #tpu.dot_dimension_numbers<[1], [0], [0], [1], [0, 0, 1, 1], [], []>} : vector<8x64xbf16>, vector<64x128xbf16>, vector<8x128xf32> -> vector<8x128xf32>
    %9 = vector.shape_cast %8 : vector<8x128xf32> to vector<1x8x128xf32>
    %c0_3 = arith.constant 0 : index
    %c0_4 = arith.constant 0 : index
    %10 = vector.load %arg3[%c0_3, %c0_4] : memref<8x128xf32, #tpu.memory_space<vmem>>, vector<8x128xf32>
    %11 = vector.shape_cast %10 : vector<8x128xf32> to vector<1x8x128xf32>
    %12 = arith.addf %9, %11 : vector<1x8x128xf32>
    %13 = vector.shape_cast %12 : vector<1x8x128xf32> to vector<8x128xf32>
    %cst_5 = arith.constant dense<0.000000e+00> : vector<8xf32>
    %14 = vector.multi_reduction <add>, %13, %cst_5 [1] : vector<8x128xf32> to vector<8xf32>
    %15 = vector.shape_cast %14 : vector<8xf32> to vector<8x1xf32>
    %16 = arith.mulf %13, %13 : vector<8x128xf32>
    %cst_6 = arith.constant dense<0.000000e+00> : vector<8xf32>
    %17 = vector.multi_reduction <add>, %16, %cst_6 [1] : vector<8x128xf32> to vector<8xf32>
    %18 = vector.shape_cast %17 : vector<8xf32> to vector<8x1xf32>
    %cst_7 = arith.constant 7.812500e-03 : f32
    %19 = vector.broadcast %cst_7 : f32 to vector<8x1xf32>
    %20 = arith.mulf %15, %19 : vector<8x1xf32>
    %cst_8 = arith.constant 7.812500e-03 : f32
    %21 = vector.broadcast %cst_8 : f32 to vector<8x1xf32>
    %22 = arith.mulf %18, %21 : vector<8x1xf32>
    %23 = arith.mulf %20, %20 : vector<8x1xf32>
    %24 = arith.subf %22, %23 : vector<8x1xf32>
    %cst_9 = arith.constant 9.99999974E-6 : f32
    %25 = vector.broadcast %cst_9 : f32 to vector<8x1xf32>
    %26 = arith.addf %24, %25 : vector<8x1xf32>
    %27 = math.rsqrt %26 : vector<8x1xf32>
    %28 = vector.broadcast %20 : vector<8x1xf32> to vector<8x128xf32>
    %29 = arith.subf %13, %28 : vector<8x128xf32>
    %30 = vector.broadcast %27 : vector<8x1xf32> to vector<8x128xf32>
    %31 = arith.mulf %29, %30 : vector<8x128xf32>
    %c0_10 = arith.constant 0 : index
    %c0_11 = arith.constant 0 : index
    %32 = vector.load %arg4[%c0_10, %c0_11] : memref<1x128xf32, #tpu.memory_space<vmem>>, vector<1x128xf32>
    %33 = vector.broadcast %32 : vector<1x128xf32> to vector<8x128xf32>
    %34 = arith.mulf %31, %33 : vector<8x128xf32>
    %c0_12 = arith.constant 0 : index
    %c0_13 = arith.constant 0 : index
    %35 = vector.load %arg5[%c0_12, %c0_13] : memref<1x128xf32, #tpu.memory_space<vmem>>, vector<1x128xf32>
    %36 = vector.broadcast %35 : vector<1x128xf32> to vector<8x128xf32>
    %37 = arith.addf %34, %36 : vector<8x128xf32>
    %c0_14 = arith.constant 0 : index
    %c0_15 = arith.constant 0 : index
    %38 = vector.load %arg6[%c0_14, %c0_15] : memref<8x128xf32, #tpu.memory_space<vmem>>, vector<8x128xf32>
    tpu.vector_store %arg6[%c0_14, %c0_15], %37 {strides = array<i32>} : memref<8x128xf32, #tpu.memory_space<vmem>>, vector<8x128xf32>,
    return
  }
  func.func @transform_0(%arg0: i32) -> (i32, i32) {
    %c0_i32 = arith.constant 0 : i32
    %c0_i32_0 = arith.constant 0 : i32
    return %arg0, %c0_i32 : i32, i32
  }
  func.func @transform_1(%arg0: i32) -> (i32, i32) {
    %c0_i32 = arith.constant 0 : i32
    %c0_i32_0 = arith.constant 0 : i32
    %c0_i32_1 = arith.constant 0 : i32
    return %c0_i32, %c0_i32_0 : i32, i32
  }
  func.func @transform_2(%arg0: i32) -> (i32, i32) {
    %c0_i32 = arith.constant 0 : i32
    %c0_i32_0 = arith.constant 0 : i32
    %c0_i32_1 = arith.constant 0 : i32
    return %c0_i32, %c0_i32_0 : i32, i32
  }
  func.func @transform_3(%arg0: i32) -> (i32, i32) {
    %c0_i32 = arith.constant 0 : i32
    %c0_i32_0 = arith.constant 0 : i32
    %c0_i32_1 = arith.constant 0 : i32
    return %c0_i32, %c0_i32_0 : i32, i32
  }
  func.func @transform_4(%arg0: i32) -> (i32, i32) {
    %c0_i32 = arith.constant 0 : i32
    %c0_i32_0 = arith.constant 0 : i32
    %c0_i32_1 = arith.constant 0 : i32
    return %c0_i32, %c0_i32_0 : i32, i32
  }
  func.func @transform_5(%arg0: i32) -> (i32, i32) {
    %c0_i32 = arith.constant 0 : i32
    %c0_i32_0 = arith.constant 0 : i32
    return %arg0, %c0_i32 : i32, i32
  }
}

</mosaic_0001>

<llo_original>
// kernel: tpu_custom_call.1
$region0: #{tpu_custom_call.1}
  #allocation0 [shape = 'u32[]', space=smem, size = 0x4, offset = 0x4, fixed_abs, tag = 'smem constant byte address 0x4 - core index']
  #allocation1 [shape = 'u32[144,128]{1,0:T(1,128)}', space=vmem, size = 0x12000, scoped, tag = 'internal scratch']
  %s0 = inlined_call_operand.vmem [shape: s32[16,1], index: 0, kind: input, shape index: {}]
  %s1 = inlined_call_operand.hbm [shape: bf16[64,128], index: 1, kind: input, shape index: {}]
  %s2 = inlined_call_operand.vmem [shape: f32[8,128], index: 2, kind: input, shape index: {}]
  %s3 = inlined_call_operand.vmem [shape: f32[1,128], index: 3, kind: input, shape index: {}]
  %s4 = inlined_call_operand.vmem [shape: f32[1,128], index: 4, kind: input, shape index: {}]
  %s5 = inlined_call_operand.hbm [shape: f32[16,128], index: 5, kind: output, shape index: {}]
  %s6 = sld [smem:[#allocation0]]
  $region57: #{tpu_custom_call.1} parent=0
    _
  %s8 = ssub.s32 1, %s6
  %s9 = scalar_select 0, %s8, %s6
  $region1: #{tpu_custom_call.1} parent=0
    #allocation2 [shape = 'u8[16384]{0}', space=vmem, size = 0x4000, scoped, tag = 'input window, operand 1, single buffered']
    #allocation3 [shape = 's32[2]{0}', space=sflag, size = 0x8, scoped, tag = 'scoped memory for tpu_custom_call.1']
    #allocation4 [shape = 's32[2]{0}', space=sflag, size = 0x8, scoped, tag = 'scoped memory for tpu_custom_call.1']
    #allocation5 [shape = 'u8[8192]{0}', space=vmem, size = 0x2000, scoped, tag = 'output window, operand 0']
    %10 = vsyncpa [#allocation3], 0
    %11 = vsyncpa [#allocation4], 0
    %s12 = scalar_lea.sflag [#allocation4], 1
    %13 = vsyncpa %s12, 0
    loop: start=0, step=1, limit=4
    $region2: #{tpu_custom_call.1} parent=1 // loop_pre_header
      _
    $region3: #{tpu_custom_call.1} parent=1 // loop_header
      %s15 = sphi 0, %s19
      %p16 = scmp.ge.s32.totalorder %s15, 4
      %s25 = sphi 0, %s27
      %s28 = sphi 0, %s25
      %s29 = sphi 0, %s28
      %s45 = sphi 0, %s29
      %s49 = sphi 0, %s49
      %s51 = sphi 0, %s49
      %s52 = sphi 0, %s51
      %s66 = sphi 0, %s52
      %s70 = sphi 0, %s70
      %s72 = sphi 0, %s70
      %s73 = sphi 0, %s72
      %s87 = sphi 0, %s73
      %s91 = sphi 0, %s91
      %s93 = sphi 0, %s91
      %s94 = sphi 0, %s93
      %s108 = sphi 0, %s94
      %s112 = sphi 0, %s112
      %s114 = sphi 0, %s112
      %s115 = sphi 0, %s114
      %s129 = sphi 0, %s115
      %s135 = sphi 0, %s137
      %s138 = sphi 0, %s135
      %s139 = sphi 0, %s138
      %s155 = sphi 0, %s139
    $region4: #{tpu_custom_call.1} parent=1 // loop_header_branch
      %18 = sbr.rel (%p16) target = $region8
    $region5: #{tpu_custom_call.1} parent=1 // loop_body
      %s20 = ssub.s32 %s15, 1
      %s21 = ssub.s32 %s15, 2
      %s22 = sadd.s32 %s15, 1
      %s23 = ssub.s32 %s15, %s22
      %p24 = scmp.eq.s32.totalorder %s23, 0
      %s26 = sadd.s32 %s25, 1
      %s27 = scalar_select %p24, %s25, %s26
      %p30 = pneg %p24
      %p31 = scmp.eq.s32.totalorder %s15, 1
      %p32 = por %p30, %p31
      %p33 = scmp.ne.s32.totalorder %s25, %s28
      %p34 = scmp.eq.s32.totalorder %s15, 0
      %p35 = por %p33, %p34
      %p36 = scmp.ne.s32.totalorder %s25, %s28
      %p37 = scmp.eq.s32.totalorder %s20, 1
      %p38 = por %p36, %p37
      %p39 = scmp.ne.s32.totalorder %s28, %s29
      %p40 = scmp.eq.s32.totalorder %s20, 0
      %p41 = por %p39, %p40
      %p42 = scmp.ne.s32.totalorder %s28, %s29
      %p43 = scmp.eq.s32.totalorder %s21, 1
      %p44 = por %p42, %p43
      %p46 = scmp.ne.s32.totalorder %s29, %s45
      %p47 = scmp.eq.s32.totalorder %s21, 0
      %p48 = por %p46, %p47
      %s50 = sadd.s32 %s49, 1
      %p53 = scmp.eq.s32.totalorder %s15, 1
      %p54 = scmp.ne.s32.totalorder %s49, %s51
      %p55 = scmp.eq.s32.totalorder %s15, 0
      %p56 = por %p54, %p55
      %p57 = scmp.ne.s32.totalorder %s49, %s51
      %p58 = scmp.eq.s32.totalorder %s20, 1
      %p59 = por %p57, %p58
      %p60 = scmp.ne.s32.totalorder %s51, %s52
      %p61 = scmp.eq.s32.totalorder %s20, 0
      %p62 = por %p60, %p61
      %p63 = scmp.ne.s32.totalorder %s51, %s52
      %p64 = scmp.eq.s32.totalorder %s21, 1
      %p65 = por %p63, %p64
      %p67 = scmp.ne.s32.totalorder %s52, %s66
      %p68 = scmp.eq.s32.totalorder %s21, 0
      %p69 = por %p67, %p68
      %s71 = sadd.s32 %s70, 1
      %p74 = scmp.eq.s32.totalorder %s15, 1
      %p75 = scmp.ne.s32.totalorder %s70, %s72
      %p76 = scmp.eq.s32.totalorder %s15, 0
      %p77 = por %p75, %p76
      %p78 = scmp.ne.s32.totalorder %s70, %s72
      %p79 = scmp.eq.s32.totalorder %s20, 1
      %p80 = por %p78, %p79
      %p81 = scmp.ne.s32.totalorder %s72, %s73
      %p82 = scmp.eq.s32.totalorder %s20, 0
      %p83 = por %p81, %p82
      %p84 = scmp.ne.s32.totalorder %s72, %s73
      %p85 = scmp.eq.s32.totalorder %s21, 1
      %p86 = por %p84, %p85
      %p88 = scmp.ne.s32.totalorder %s73, %s87
      %p89 = scmp.eq.s32.totalorder %s21, 0
      %p90 = por %p88, %p89
      %s92 = sadd.s32 %s91, 1
      %p95 = scmp.eq.s32.totalorder %s15, 1
      %p96 = scmp.ne.s32.totalorder %s91, %s93
      %p97 = scmp.eq.s32.totalorder %s15, 0
      %p98 = por %p96, %p97
      %p99 = scmp.ne.s32.totalorder %s91, %s93
      %p100 = scmp.eq.s32.totalorder %s20, 1
      %p101 = por %p99, %p100
      %p102 = scmp.ne.s32.totalorder %s93, %s94
      %p103 = scmp.eq.s32.totalorder %s20, 0
      %p104 = por %p102, %p103
      %p105 = scmp.ne.s32.totalorder %s93, %s94
      %p106 = scmp.eq.s32.totalorder %s21, 1
      %p107 = por %p105, %p106
      %p109 = scmp.ne.s32.totalorder %s94, %s108
      %p110 = scmp.eq.s32.totalorder %s21, 0
      %p111 = por %p109, %p110
      %s113 = sadd.s32 %s112, 1
      %p116 = scmp.eq.s32.totalorder %s15, 1
      %p117 = scmp.ne.s32.totalorder %s112, %s114
      %p118 = scmp.eq.s32.totalorder %s15, 0
      %p119 = por %p117, %p118
      %p120 = scmp.ne.s32.totalorder %s112, %s114
      %p121 = scmp.eq.s32.totalorder %s20, 1
      %p122 = por %p120, %p121
      %p123 = scmp.ne.s32.totalorder %s114, %s115
      %p124 = scmp.eq.s32.totalorder %s20, 0
      %p125 = por %p123, %p124
      %p126 = scmp.ne.s32.totalorder %s114, %s115
      %p127 = scmp.eq.s32.totalorder %s21, 1
      %p128 = por %p126, %p127
      %p130 = scmp.ne.s32.totalorder %s115, %s129
      %p131 = scmp.eq.s32.totalorder %s21, 0
      %p132 = por %p130, %p131
      %s133 = ssub.s32 %s15, %s22
      %p134 = scmp.eq.s32.totalorder %s133, 0
      %s136 = sadd.s32 %s135, 1
      %s137 = scalar_select %p134, %s135, %s136
      %p140 = pneg %p134
      %p141 = scmp.eq.s32.totalorder %s15, 1
      %p142 = por %p140, %p141
      %p143 = scmp.ne.s32.totalorder %s135, %s138
      %p144 = scmp.eq.s32.totalorder %s15, 0
      %p145 = por %p143, %p144
      %p146 = scmp.ne.s32.totalorder %s135, %s138
      %p147 = scmp.eq.s32.totalorder %s20, 1
      %p148 = por %p146, %p147
      %p149 = scmp.ne.s32.totalorder %s138, %s139
      %p150 = scmp.eq.s32.totalorder %s20, 0
      %p151 = por %p149, %p150
      %p152 = scmp.ne.s32.totalorder %s138, %s139
      %p153 = scmp.eq.s32.totalorder %s21, 1
      %p154 = por %p152, %p153
      %p156 = scmp.ne.s32.totalorder %s139, %s155
      %p157 = scmp.eq.s32.totalorder %s21, 0
      %p158 = por %p156, %p157
      %p159 = scmp.le.s32.totalorder 1, %s15
      %p160 = scmp.lt.s32.totalorder %s15, 3
      %p161 = pnand %p159, %p160
      %p162 = pneg %p161
      // Predicated region
      $region9: #{tpu_custom_call.1} parent=5 // pred_check
        _
      $region10: #{tpu_custom_call.1} parent=5 // pred_check_branch
        %164 = sbr.rel (%p161) target = $region12
      $region11: #{tpu_custom_call.1} parent=5 // pred_region
        %s165 = ssub.s32 %s15, 1
        // Predicated region
        $region13: #{tpu_custom_call.1} parent=11 // pred_check
          %p166 = pneg %p62
        $region14: #{tpu_custom_call.1} parent=11 // pred_check_branch
          %168 = sbr.rel (%p166) target = $region16
        $region15: #{tpu_custom_call.1} parent=11 // pred_region
          %s170 = ssub.s32 512, 512
          %171 = vsyncadd [#allocation3], %s170
          %s172 = sshll.u32 [#allocation2], 4
          %s173 = int_to_ptr.vmem [resolvable:$true] %s172
          %178 = dma.hbm_to_vmem [thread:$0]  %s1, 512, %s173, [#allocation3], 64, 64, 4
        $region16: #{tpu_custom_call.1} parent=11 // pred_fallthru
          _
        // Predicated region
        $region17: #{tpu_custom_call.1} parent=11 // pred_check
          %p179 = pneg %p83
        $region18: #{tpu_custom_call.1} parent=11 // pred_check_branch
          %181 = sbr.rel (%p179) target = $region20
        $region19: #{tpu_custom_call.1} parent=11 // pred_region
          _
        $region20: #{tpu_custom_call.1} parent=11 // pred_fallthru
          _
        // Predicated region
        $region21: #{tpu_custom_call.1} parent=11 // pred_check
          %p182 = pneg %p104
        $region22: #{tpu_custom_call.1} parent=11 // pred_check_branch
          %184 = sbr.rel (%p182) target = $region24
        $region23: #{tpu_custom_call.1} parent=11 // pred_region
          _
        $region24: #{tpu_custom_call.1} parent=11 // pred_fallthru
          _
        // Predicated region
        $region25: #{tpu_custom_call.1} parent=11 // pred_check
          %p185 = pneg %p125
        $region26: #{tpu_custom_call.1} parent=11 // pred_check_branch
          %187 = sbr.rel (%p185) target = $region28
        $region27: #{tpu_custom_call.1} parent=11 // pred_region
          _
        $region28: #{tpu_custom_call.1} parent=11 // pred_fallthru
          _
      $region12: #{tpu_custom_call.1} parent=5 // pred_fallthru
        _
      %p188 = scmp.lt.s32.totalorder %s15, 2
      // Predicated region
      $region29: #{tpu_custom_call.1} parent=5 // pred_check
        %p189 = pneg %p188
      $region30: #{tpu_custom_call.1} parent=5 // pred_check_branch
        %191 = sbr.rel (%p189) target = $region32
      $region31: #{tpu_custom_call.1} parent=5 // pred_region
        // Predicated region
        $region33: #{tpu_custom_call.1} parent=31 // pred_check
          %p192 = pneg %p35
        $region34: #{tpu_custom_call.1} parent=31 // pred_check_branch
          %194 = sbr.rel (%p192) target = $region36
        $region35: #{tpu_custom_call.1} parent=31 // pred_region
          %p195 = scmp.lt.s32.totalorder %s15, 1
          %s196 = scalar_select %p195, %s15, 1
          %s197 = smul.addr %s196, 8
          %s198 = scalar_lea.vmem %s0, %s197
        $region36: #{tpu_custom_call.1} parent=31 // pred_fallthru
          _
      $region32: #{tpu_custom_call.1} parent=5 // pred_fallthru
        _
      %p199 = scmp.le.s32.totalorder 1, %s15
      %p200 = scmp.lt.s32.totalorder %s15, 3
      %p201 = pnand %p199, %p200
      %p202 = pneg %p201
      // Predicated region
      $region37: #{tpu_custom_call.1} parent=5 // pred_check
        _
      $region38: #{tpu_custom_call.1} parent=5 // pred_check_branch
        %204 = sbr.rel (%p201) target = $region40
      $region39: #{tpu_custom_call.1} parent=5 // pred_region
        %s205 = ssub.s32 %s15, 1
        // Predicated region
        $region41: #{tpu_custom_call.1} parent=39 // pred_check
          %p206 = pneg %p62
        $region42: #{tpu_custom_call.1} parent=39 // pred_check_branch
          %208 = sbr.rel (%p206) target = $region44
        $region43: #{tpu_custom_call.1} parent=39 // pred_region
          %209 = dma.done [#allocation3], 512
        $region44: #{tpu_custom_call.1} parent=39 // pred_fallthru
          _
        %p210 = scmp.lt.s32.totalorder %s20, 1
        %s211 = scalar_select %p210, %s20, 1
        %s212 = smul.addr %s211, 8
        %s213 = scalar_lea.vmem %s0, %s212
        %p214 = pneg %p41
        %p215 = pneg %p38
        %p216 = pneg %p62
        %p217 = pneg %p59
        %p218 = pneg %p83
        %p219 = pneg %p80
        %p220 = pneg %p104
        %p221 = pneg %p101
        %p222 = pneg %p125
        %p223 = pneg %p122
        %p224 = pneg %p151
        %p225 = pneg %p148
        %s226 = sand.u32 %s138, 1
        %s227 = scalar_lea.sflag [#allocation4], %s226
        %s228 = sand.u32 %s138, 1
        %s229 = smul.addr %s228, 8
        %s230 = scalar_lea.vmem [#allocation5], %s229
        %p231 = scmp.lt.s32.totalorder %s20, 1
        %s232 = scalar_select %p231, %s20, 1
        %s233 = smul.addr %s232, 8
        %s234 = scalar_lea.vmem %s0, %s233
        %v236 = vld [vmem:[%s234] sm:$0xff]
        %v237 = vlaneseq
        %v238 = vand.u32 %v237, 127
        %239 = vset.pattern.permute.xlu0 0
        %240 = vperm.xlu0 %239, %v236
        %v241 = vpop.permute.xlu0 %240
        %vm242 = vcmp.eq.s32.totalorder %v241, %v238
        %v243 = vsel %vm242, 1, 0
        %v244 = vcvt.s32.f32 %v243
        %v245 = vpack.c.bf16 %v244, %v244
        %v246 = vld [vmem:[#allocation2] sm:$0xf]
        %v247 = vld [vmem:[#allocation2 + $0x4] sm:$0xf]
        %v248 = vld [vmem:[#allocation2 + $0x8] sm:$0xf]
        %v249 = vld [vmem:[#allocation2 + $0xc] sm:$0xf]
        %v250 = vld [vmem:[#allocation2 + $0x10] sm:$0xf]
        %v251 = vld [vmem:[#allocation2 + $0x14] sm:$0xf]
        %v252 = vld [vmem:[#allocation2 + $0x18] sm:$0xf]
        %v253 = vld [vmem:[#allocation2 + $0x1c] sm:$0xf]
        %v262 = vunpack.c.l.b16 %v246
        %v263 = vunpack.c.l.b16 %v247
        %v264 = vunpack.c.l.b16 %v248
        %v265 = vunpack.c.l.b16 %v249
        %v266 = vunpack.c.l.b16 %v250
        %v267 = vunpack.c.l.b16 %v251
        %v268 = vunpack.c.l.b16 %v252
        %v269 = vunpack.c.l.b16 %v253
        %v270 = vpack.c.b16 %v263, %v262
        %v271 = vpack.c.b16 %v265, %v264
        %v272 = vpack.c.b16 %v267, %v266
        %v273 = vpack.c.b16 %v269, %v268
        %vm278 = vcmask 523264
        %v280 = vsel %vm278, %v245, 0
        %282 = vmatprep.subr.bf16.mxu0 0
        %283 = vmatpush1.bf16.msra.mxu0 %v270
        %284 = vmatprep.subr.bf16.mxu0 0
        %285 = vmatpush1.bf16.msra.mxu0 %v271
        %286 = vmatprep.subr.bf16.mxu0 0
        %287 = vmatpush1.bf16.msra.mxu0 %v272
        %288 = vmatprep.subr.bf16.mxu0 0
        %289 = vmatpush1.bf16.msra.mxu0 %v273
        %290 = vmatprep.subr.bf16.mxu0 0
        %291 = vmatpush1.bf16.msra.mxu0 0
        %292 = vmatprep.subr.bf16.mxu0 0
        %293 = vmatpush1.bf16.msra.mxu0 0
        %294 = vmatprep.subr.bf16.mxu0 0
        %295 = vmatpush1.bf16.msra.mxu0 0
        %296 = vmatprep.subr.bf16.mxu0 0
        %297 = vmatpush1.bf16.msra.mxu0 0
        %298 = vmatprep.subr.bf16.mxu0 0
        %299 = vmatpush1.bf16.msra.mxu0 0
        %300 = vmatprep.subr.bf16.mxu0 0
        %301 = vmatpush1.bf16.msra.mxu0 0
        %302 = vmatprep.subr.bf16.mxu0 0
        %303 = vmatpush1.bf16.msra.mxu0 0
        %304 = vmatprep.subr.bf16.mxu0 0
        %305 = vmatpush1.bf16.msra.mxu0 0
        %306 = vmatprep.subr.bf16.mxu0 0
        %307 = vmatpush1.bf16.msra.mxu0 0
        %308 = vmatprep.subr.bf16.mxu0 0
        %309 = vmatpush1.bf16.msra.mxu0 0
        %310 = vmatprep.subr.bf16.mxu0 0
        %311 = vmatpush1.bf16.msra.mxu0 0
        %312 = vmatprep.subr.bf16.mxu0 0
        %313 = vmatpush1.bf16.msra.mxu0 0
        %314 = vmatprep.mubr.bf16.mxu0 0
        %315 = vmatmul.mubr.bf16.gmra.mrb[0].mxu0 %v280
        %v316 = vpop.f32.mrb[0].mxu0
        %v317 = vadd.f32 0.0, %v316
        %v318 = vpop.f32.mrb[0].mxu0
        %v319 = vpop.f32.mrb[0].mxu0
        %v320 = vpop.f32.mrb[0].mxu0
        %321 = vdwg.mxu0
        %v322 = vld [vmem:[%s2] sm:$0xff]
        %v323 = vadd.f32 %v317, %v322
        %324 = vadd.xlane.f32.xlu0 %v323
        %v325 = vpop.xlane.xlu0 %324
        %v326 = vmul.f32 %v323, %v323
        %327 = vadd.xlane.f32.xlu0 %v326
        %v328 = vpop.xlane.xlu0 %327
        %v329 = vmul.f32 %v325, 0.0078125
        %v330 = vmul.f32 %v328, 0.0078125
        %v331 = vmul.f32 %v329, %v329
        %v332 = vsub.f32 %v330, %v331
        %v333 = vadd.f32 %v332, 1e-05
        %v334 = vrsqrt.pop %v333
        %v335 = vsub.f32 %v323, %v329
        %v336 = vmul.f32 %v335, %v334
        %v337 = vld [vmem:[%s3] sm:$0x1]
        %v339 = vlaneseq
        %v340 = vshrl.u32 %v339, 7
        %v341 = vsub.s32 0, %v340
        %v342 = vrot.slane %v337, %v341
        %v344 = vmul.f32 %v336, %v342
        %v345 = vld [vmem:[%s4] sm:$0x1]
        %v347 = vlaneseq
        %v348 = vshrl.u32 %v347, 7
        %v349 = vsub.s32 0, %v348
        %v350 = vrot.slane %v345, %v349
        %v352 = vadd.f32 %v344, %v350
        %353 = vst [vmem:[%s230] sm:$0xff] %v352
        %s354 = sand.u32 %s138, 1
        %s355 = scalar_lea.sflag [#allocation4], %s354
        %s356 = sand.u32 %s138, 1
        %s357 = smul.addr %s356, 8
        %s358 = scalar_lea.vmem [#allocation5], %s357
        // Predicated region
        $region45: #{tpu_custom_call.1} parent=39 // pred_check
          %p359 = pneg %p148
        $region46: #{tpu_custom_call.1} parent=39 // pred_check_branch
          %361 = sbr.rel (%p359) target = $region48
        $region47: #{tpu_custom_call.1} parent=39 // pred_region
          %s363 = ssub.s32 128, 128
          %364 = vsyncadd %s355, %s363
          %s365 = smul.addr %s20, 128
          %s366 = scalar_lea.hbm %s5, %s365
          %s368 = sshll.u32 %s358, 4
          %s369 = int_to_ptr.vmem [resolvable:$true] %s368
          %371 = dma.vmem_to_hbm [thread:$0]  %s369, 128, %s366, %s355
        $region48: #{tpu_custom_call.1} parent=39 // pred_fallthru
          _
      $region40: #{tpu_custom_call.1} parent=5 // pred_fallthru
        _
      %p372 = scmp.le.s32.totalorder 2, %s15
      // Predicated region
      $region49: #{tpu_custom_call.1} parent=5 // pred_check
        %p373 = pneg %p372
      $region50: #{tpu_custom_call.1} parent=5 // pred_check_branch
        %375 = sbr.rel (%p373) target = $region52
      $region51: #{tpu_custom_call.1} parent=5 // pred_region
        %s376 = ssub.s32 %s15, 2
        // Predicated region
        $region53: #{tpu_custom_call.1} parent=51 // pred_check
          %p377 = pneg %p154
        $region54: #{tpu_custom_call.1} parent=51 // pred_check_branch
          %379 = sbr.rel (%p377) target = $region56
        $region55: #{tpu_custom_call.1} parent=51 // pred_region
          %s380 = sand.u32 %s139, 1
          %s381 = scalar_lea.sflag [#allocation4], %s380
          %s382 = sand.u32 %s139, 1
          %s383 = smul.addr %s382, 8
          %s384 = scalar_lea.vmem [#allocation5], %s383
          %385 = dma.done %s381, 128
        $region56: #{tpu_custom_call.1} parent=51 // pred_fallthru
          _
      $region52: #{tpu_custom_call.1} parent=5 // pred_fallthru
        _
    $region6: #{tpu_custom_call.1} parent=1 // loop_footer
      %s19 = sadd.s32 1, %s15
    $region7: #{tpu_custom_call.1} parent=1 // loop_footer_branch
      %14 = sbr.rel target = $region3
    $region8: #{tpu_custom_call.1} parent=1 // loop_exit
      _
    %386 = vsyncpa [#allocation3], 1
    %s387 = scalar_lea.sflag [#allocation3], 1
    %388 = vsyncpa %s387, 1
    %389 = vsyncpa [#allocation4], 1
    %s390 = scalar_lea.sflag [#allocation4], 1
    %391 = vsyncpa %s390, 1

</llo_original>
